<compile_context>
chip_gen: v5e
topology: v5e:2x2
jax: 0.10.0
libtpu: 0.0.40
codegen_flags: <defaults>
</compile_context>

<pallas_src>
import jax
import jax.numpy as jnp
from jax.experimental import pallas as pl
from jax.experimental.pallas import tpu as pltpu

NEG_INF = -9e15
LEAKY_SLOPE = 0.2


def _round_up(x, m):
    return (x + m - 1) // m * m


def project_kernel(x_ref, w_ref, b_ref, a12_ref, wh_ref, whij_ref):
    # x_ref: (TM, D)  w_ref: (D, Hp)  b_ref: (1, Hp)  a12_ref: (Hp, 2)
    # Wh = x @ W + b   (bf16 operands, f32 accumulation on the MXU)
    wh = jnp.dot(x_ref[...].astype(jnp.bfloat16),
                 w_ref[...].astype(jnp.bfloat16),
                 preferred_element_type=jnp.float32) + b_ref[...]
    wh_ref[...] = wh
    # [Whi | Whj] = Wh @ [a1 | a2]   (single folded matmul, output width 2)
    whij_ref[...] = jnp.dot(wh.astype(jnp.bfloat16),
                            a12_ref[...].astype(jnp.bfloat16),
                            preferred_element_type=jnp.float32)


def attention_kernel(whi_ref, whj_row_ref, adj_ref, wh_all_ref, wh_q_ref, out_ref):
    # whi_ref: (TM, 1)  whj_row_ref: (1, N)  adj_ref: (TM, N) int8
    # wh_all_ref: (N, Hp) full Wh (VMEM resident)  wh_q_ref: (TM, Hp) residual tile
    # e[i, j] = leakyrelu(Whi[i] + Whj[j]), masked where adj == 0 (fused where-chain)
    e = whi_ref[...] + whj_row_ref[...]                       # (TM,1)+(1,N) -> (TM,N), VPU bcast
    mask = adj_ref[...].astype(jnp.int32) > 0
    e = jnp.where(mask, jnp.where(e > 0, e, LEAKY_SLOPE * e), NEG_INF)

    # row softmax in f32; normalization via approx reciprocal on the EUP slot
    m = jnp.max(e, axis=-1, keepdims=True)
    p = jnp.exp(e - m)
    attn = p * pl.reciprocal(jnp.sum(p, axis=-1, keepdims=True), approx=True)

    # dropout(p=0.5): identity in eval mode
    # TODO(synk): training-mode dropout (random masking of attention) not implemented.

    # node_fea_new = attention @ Wh + Wh   (bf16 operands, f32 accumulation)
    out_ref[...] = jnp.dot(attn.astype(jnp.bfloat16),
                           wh_all_ref[...].astype(jnp.bfloat16),
                           preferred_element_type=jnp.float32) + wh_q_ref[...]


def gat_layer_forward(node_fea, edge_fea, adj, params, *, tile_m=256):
    """Pallas implementation of GAT_layer.forward with is_mix_attention=False (eval mode)."""
    N, D = node_fea.shape
    H = params["W_w"].shape[1]
    # a1/a2 are applied to Wh in the reference module => node_size must equal hidden_size.
    assert params["a1"].shape[0] == H and params["a2"].shape[0] == H, \
        "GAT_layer requires node_size == hidden_size (a1/a2 are applied to Wh)"

    # Lane-dense outputs: pad hidden dim to a multiple of 128 (padded cols are exactly zero).
    Hp = _round_up(H, 128)
    w_p = jnp.zeros((D, Hp), jnp.float32).at[:, :H].set(params["W_w"])
    b_p = jnp.zeros((1, Hp), jnp.float32).at[:, :H].set(params["W_b"])
    a12 = (jnp.zeros((Hp, 2), jnp.float32)
           .at[:H, 0:1].set(params["a1"])
           .at[:H, 1:2].set(params["a2"]))

    # Row tile: whole problem as one block when N is small; up to 256 rows otherwise.
    # (On v5e prefer tile_m=128 via the keyword argument.)
    tile_m = min(tile_m, N)
    assert N % tile_m == 0, "N must be divisible by the row tile"
    grid = (N // tile_m,)

    cparams = pltpu.CompilerParams(
        dimension_semantics=("parallel",),
        vmem_limit_bytes=64 * 1024 * 1024,   # safe on v5e/v6e/v7x, above the scoped default
    )

    # ---- Stage 1: hoisted projection (computed once, not per attention tile) ----
    wh, whij = pl.pallas_call(
        project_kernel,
        out_shape=(jax.ShapeDtypeStruct((N, Hp), jnp.float32),
                   jax.ShapeDtypeStruct((N, 2), jnp.float32)),
        grid=grid,
        in_specs=[
            pl.BlockSpec((tile_m, D), lambda i: (i, 0)),   # node feature row tile
            pl.BlockSpec((D, Hp), lambda i: (0, 0)),       # W (resident)
            pl.BlockSpec((1, Hp), lambda i: (0, 0)),       # bias (resident)
            pl.BlockSpec((Hp, 2), lambda i: (0, 0)),       # [a1|a2] (resident)
        ],
        out_specs=(pl.BlockSpec((tile_m, Hp), lambda i: (i, 0)),
                   pl.BlockSpec((tile_m, 2), lambda i: (i, 0))),
        compiler_params=cparams,
    )(node_fea, w_p, b_p, a12)

    whi = whij[:, 0:1]              # (N, 1)
    whj_row = whij[:, 1:2].T        # (1, N) lane-dense row for VPU broadcast

    # O(N^2) adjacency streamed as int8 — the kernel only needs adj > 0.
    adj_i8 = (adj > 0).astype(jnp.int8)

    # ---- Stage 2: masked attention + aggregation ----
    node_new_p = pl.pallas_call(
        attention_kernel,
        out_shape=jax.ShapeDtypeStruct((N, Hp), jnp.float32),
        grid=grid,
        in_specs=[
            pl.BlockSpec((tile_m, 1), lambda i: (i, 0)),    # Whi tile
            pl.BlockSpec((1, N), lambda i: (0, 0)),         # Whj row (resident)
            pl.BlockSpec((tile_m, N), lambda i: (i, 0)),    # adjacency rows (int8)
            pl.BlockSpec((N, Hp), lambda i: (0, 0)),        # full Wh (resident)
            pl.BlockSpec((tile_m, Hp), lambda i: (i, 0)),   # Wh query tile (residual)
        ],
        out_specs=pl.BlockSpec((tile_m, Hp), lambda i: (i, 0)),
        compiler_params=cparams,
    )(whi, whj_row, adj_i8, wh, wh)

    node_new = node_new_p[:, :H]
    # is_mix_attention=False path: edge features pass through unchanged.
    return node_new, edge_fea


if __name__ == "__main__":
    key = jax.random.PRNGKey(0)
    N = 16
    node_size = 32      # must equal hidden_size (a1/a2 are applied to Wh)
    hidden_size = 32
    edge_size = 8

    k1, k2, k3, k4, k5, k6, k7 = jax.random.split(key, 7)
    node_fea = jax.random.normal(k1, (N, node_size), jnp.float32)
    edge_fea = jax.random.normal(k2, (N, N, edge_size), jnp.float32)
    adj = (jax.random.uniform(k3, (N, N)) > 0.4).astype(jnp.float32)
    adj = adj.at[jnp.arange(N), jnp.arange(N)].set(1.0)  # ensure every row has a neighbor

    scale = 1.0 / float(jnp.sqrt(node_size))
    params = {
        "W_w": jax.random.uniform(k4, (node_size, hidden_size), jnp.float32, -scale, scale),
        "W_b": jax.random.uniform(k5, (1, hidden_size), jnp.float32, -scale, scale),
        "a1": jax.random.uniform(k6, (node_size, 1), jnp.float32, -scale, scale),
        "a2": jax.random.uniform(k7, (node_size, 1), jnp.float32, -scale, scale),
    }

    node_new, edge_new = gat_layer_forward(node_fea, edge_fea, adj, params)
    jax.block_until_ready((node_new, edge_new))

    # pure-JAX reference mirroring the kernel's bf16-operand / f32-accumulation matmuls
    wh_ref = jnp.dot(node_fea.astype(jnp.bfloat16), params["W_w"].astype(jnp.bfloat16),
                     preferred_element_type=jnp.float32) + params["W_b"]
    whi_ref = jnp.dot(wh_ref.astype(jnp.bfloat16), params["a1"].astype(jnp.bfloat16),
                      preferred_element_type=jnp.float32)
    whj_ref = jnp.dot(wh_ref.astype(jnp.bfloat16), params["a2"].astype(jnp.bfloat16),
                      preferred_element_type=jnp.float32)
    e_ref = whi_ref + whj_ref.T
    e_ref = jnp.where(e_ref > 0, e_ref, LEAKY_SLOPE * e_ref)
    e_ref = jnp.where(adj > 0, e_ref, NEG_INF)
    attn_ref = jax.nn.softmax(e_ref, axis=-1)
    ref = jnp.dot(attn_ref.astype(jnp.bfloat16), wh_ref.astype(jnp.bfloat16),
                  preferred_element_type=jnp.float32) + wh_ref

    assert jnp.allclose(node_new, ref, atol=2e-2, rtol=2e-2), "mismatch vs reference"
    assert jnp.array_equal(edge_new, edge_fea)
    print("KERNEL_OK")
</pallas_src>

<mosaic_0001>
module attributes {stable_mosaic.version = 11 : i64} {
  func.func @project_kernel(%arg0: i32, %arg1: memref<16x32xf32, #tpu.memory_space<vmem>>, %arg2: memref<32x128xf32, #tpu.memory_space<vmem>>, %arg3: memref<1x128xf32, #tpu.memory_space<vmem>>, %arg4: memref<128x2xf32, #tpu.memory_space<vmem>>, %arg5: memref<16x128xf32, #tpu.memory_space<vmem>>, %arg6: memref<16x2xf32, #tpu.memory_space<vmem>>) attributes {dimension_semantics = [#tpu.dimension_semantics<parallel>], iteration_bounds = array<i64: 1>, scalar_prefetch = 0 : i64, scratch_operands = 0 : i64, tpu.core_type = #tpu.core_type<tc>, window_params = [{transform_indices = @transform_0, window_bounds = array<i64: 16, 32>}, {pipeline_mode = #tpu.pipeline_mode<synchronous>, transform_indices = @transform_1, window_bounds = array<i64: 32, 128>}, {pipeline_mode = #tpu.pipeline_mode<synchronous>, transform_indices = @transform_2, window_bounds = array<i64: 1, 128>}, {pipeline_mode = #tpu.pipeline_mode<synchronous>, transform_indices = @transform_3, window_bounds = array<i64: 128, 2>}, {transform_indices = @transform_4, window_bounds = array<i64: 16, 128>}, {transform_indices = @transform_5, window_bounds = array<i64: 16, 2>}]} {
    %c0 = arith.constant 0 : index
    %c0_0 = arith.constant 0 : index
    %0 = vector.load %arg1[%c0, %c0_0] : memref<16x32xf32, #tpu.memory_space<vmem>>, vector<16x32xf32>
    %1 = arith.truncf %0 : vector<16x32xf32> to vector<16x32xbf16>
    %c0_1 = arith.constant 0 : index
    %c0_2 = arith.constant 0 : index
    %2 = vector.load %arg2[%c0_1, %c0_2] : memref<32x128xf32, #tpu.memory_space<vmem>>, vector<32x128xf32>
    %3 = arith.truncf %2 : vector<32x128xf32> to vector<32x128xbf16>
    %cst = arith.constant dense<0.000000e+00> : vector<16x128xf32>
    %4 = tpu.matmul %1, %3, %cst {dimension_numbers = #tpu.dot_dimension_numbers<[1], [0], [0], [1], [0, 0, 1, 1], [], []>} : vector<16x32xbf16>, vector<32x128xbf16>, vector<16x128xf32> -> vector<16x128xf32>
    %c0_3 = arith.constant 0 : index
    %c0_4 = arith.constant 0 : index
    %5 = vector.load %arg3[%c0_3, %c0_4] : memref<1x128xf32, #tpu.memory_space<vmem>>, vector<1x128xf32>
    %6 = vector.broadcast %5 : vector<1x128xf32> to vector<16x128xf32>
    %7 = arith.addf %4, %6 : vector<16x128xf32>
    %c0_5 = arith.constant 0 : index
    %c0_6 = arith.constant 0 : index
    %8 = vector.load %arg5[%c0_5, %c0_6] : memref<16x128xf32, #tpu.memory_space<vmem>>, vector<16x128xf32>
    tpu.vector_store %arg5[%c0_5, %c0_6], %7 {strides = array<i32>} : memref<16x128xf32, #tpu.memory_space<vmem>>, vector<16x128xf32>,
    %9 = arith.truncf %7 : vector<16x128xf32> to vector<16x128xbf16>
    %c0_7 = arith.constant 0 : index
    %c0_8 = arith.constant 0 : index
    %10 = vector.load %arg4[%c0_7, %c0_8] : memref<128x2xf32, #tpu.memory_space<vmem>>, vector<128x2xf32>
    %11 = arith.truncf %10 : vector<128x2xf32> to vector<128x2xbf16>
    %cst_9 = arith.constant dense<0.000000e+00> : vector<16x2xf32>
    %12 = tpu.matmul %9, %11, %cst_9 {dimension_numbers = #tpu.dot_dimension_numbers<[1], [0], [0], [1], [0, 0, 1, 1], [], []>} : vector<16x128xbf16>, vector<128x2xbf16>, vector<16x2xf32> -> vector<16x2xf32>
    %c0_10 = arith.constant 0 : index
    %c0_11 = arith.constant 0 : index
    %13 = vector.load %arg6[%c0_10, %c0_11] : memref<16x2xf32, #tpu.memory_space<vmem>>, vector<16x2xf32>
    tpu.vector_store %arg6[%c0_10, %c0_11], %12 {strides = array<i32>} : memref<16x2xf32, #tpu.memory_space<vmem>>, vector<16x2xf32>,
    return
  }
  func.func @transform_0(%arg0: i32) -> (i32, i32) {
    %c0_i32 = arith.constant 0 : i32
    %c0_i32_0 = arith.constant 0 : i32
    return %arg0, %c0_i32 : i32, i32
  }
  func.func @transform_1(%arg0: i32) -> (i32, i32) {
    %c0_i32 = arith.constant 0 : i32
    %c0_i32_0 = arith.constant 0 : i32
    %c0_i32_1 = arith.constant 0 : i32
    return %c0_i32, %c0_i32_0 : i32, i32
  }
  func.func @transform_2(%arg0: i32) -> (i32, i32) {
    %c0_i32 = arith.constant 0 : i32
    %c0_i32_0 = arith.constant 0 : i32
    %c0_i32_1 = arith.constant 0 : i32
    return %c0_i32, %c0_i32_0 : i32, i32
  }
  func.func @transform_3(%arg0: i32) -> (i32, i32) {
    %c0_i32 = arith.constant 0 : i32
    %c0_i32_0 = arith.constant 0 : i32
    %c0_i32_1 = arith.constant 0 : i32
    return %c0_i32, %c0_i32_0 : i32, i32
  }
  func.func @transform_4(%arg0: i32) -> (i32, i32) {
    %c0_i32 = arith.constant 0 : i32
    %c0_i32_0 = arith.constant 0 : i32
    return %arg0, %c0_i32 : i32, i32
  }
  func.func @transform_5(%arg0: i32) -> (i32, i32) {
    %c0_i32 = arith.constant 0 : i32
    %c0_i32_0 = arith.constant 0 : i32
    return %arg0, %c0_i32 : i32, i32
  }
}

</mosaic_0001>

<llo_original>
// kernel: tpu_custom_call.1
$region0: #{tpu_custom_call.1}
  #allocation0 [shape = 'u32[]', space=smem, size = 0x4, offset = 0x4, fixed_abs, tag = 'smem constant byte address 0x4 - core index']
  #allocation1 [shape = 'u32[72,128]{1,0:T(1,128)}', space=vmem, size = 0x9000, scoped, tag = 'internal scratch']
  %s0 = inlined_call_operand.vmem [shape: f32[16,32], index: 0, kind: input, shape index: {}]
  %s1 = inlined_call_operand.vmem [shape: f32[32,128], index: 1, kind: input, shape index: {}]
  %s2 = inlined_call_operand.vmem [shape: f32[1,128], index: 2, kind: input, shape index: {}]
  %s3 = inlined_call_operand.vmem [shape: f32[128,2], index: 3, kind: input, shape index: {}]
  %s4 = inlined_call_operand.hbm [shape: f32[16,128], index: 4, kind: output, shape index: {0}]
  %s5 = inlined_call_operand.vmem [shape: f32[16,2], index: 5, kind: output, shape index: {1}]
  %6 = xla_tuple %s4, %s5
  %s7 = sld [smem:[#allocation0]]
  $region34: #{tpu_custom_call.1} parent=0
    _
  %s9 = ssub.s32 1, %s7
  %s10 = scalar_select 0, %s9, %s7
  $region1: #{tpu_custom_call.1} parent=0
    #allocation2 [shape = 'u8[8192]{0}', space=vmem, size = 0x2000, scoped, tag = 'output window, operand 0, single buffered']
    #allocation3 [shape = 's32[1]{0}', space=sflag, size = 0x4, scoped, tag = 'scoped memory for tpu_custom_call.1']
    %11 = vsyncpa [#allocation3], 0
    // Predicated region
    $region2: #{tpu_custom_call.1} parent=1 // pred_check
      _
    $region3: #{tpu_custom_call.1} parent=1 // pred_check_branch
      %13 = sbr.rel (0) target = $region5
    $region4: #{tpu_custom_call.1} parent=1 // pred_region
      _
    $region5: #{tpu_custom_call.1} parent=1 // pred_fallthru
      _
    // Predicated region
    $region6: #{tpu_custom_call.1} parent=1 // pred_check
      _
    $region7: #{tpu_custom_call.1} parent=1 // pred_check_branch
      %15 = sbr.rel (0) target = $region9
    $region8: #{tpu_custom_call.1} parent=1 // pred_region
      _
    $region9: #{tpu_custom_call.1} parent=1 // pred_fallthru
      _
    // Predicated region
    $region10: #{tpu_custom_call.1} parent=1 // pred_check
      _
    $region11: #{tpu_custom_call.1} parent=1 // pred_check_branch
      %17 = sbr.rel (0) target = $region13
    $region12: #{tpu_custom_call.1} parent=1 // pred_region
      _
    $region13: #{tpu_custom_call.1} parent=1 // pred_fallthru
      _
    // Predicated region
    $region14: #{tpu_custom_call.1} parent=1 // pred_check
      _
    $region15: #{tpu_custom_call.1} parent=1 // pred_check_branch
      %19 = sbr.rel (0) target = $region17
    $region16: #{tpu_custom_call.1} parent=1 // pred_region
      _
    $region17: #{tpu_custom_call.1} parent=1 // pred_fallthru
      _
    %v21 = vld [vmem:[%s0] sm:$0xff]
    %v22 = vld [vmem:[%s0 + $0x8] sm:$0xff]
    %v23 = vpack.c.bf16 %v22, %v21
    %v24 = vld [vmem:[%s1] sm:$0xff]
    %v25 = vld [vmem:[%s1 + $0x8] sm:$0xff]
    %v26 = vld [vmem:[%s1 + $0x10] sm:$0xff]
    %v27 = vld [vmem:[%s1 + $0x18] sm:$0xff]
    %v28 = vpack.c.bf16 %v25, %v24
    %v29 = vpack.c.bf16 %v27, %v26
    %v30 = vld [vmem:[%s2] sm:$0x1]
    %v32 = vperm.slane %v30, 0
    %vm34 = vcmask 261120
    %v36 = vsel %vm34, %v23, 0
    %38 = vmatpush.bf16.msra.mxu0 0
    %39 = vmatpush.bf16.msra.mxu0 0
    %40 = vmatpush.bf16.msra.mxu0 0
    %41 = vmatpush.bf16.msra.mxu0 0
    %42 = vmatpush.bf16.msra.mxu0 0
    %43 = vmatpush.bf16.msra.mxu0 0
    %44 = vmatpush.bf16.msra.mxu0 %v29
    %45 = vmatpush.bf16.msra.mxu0 %v28
    %46 = vmatmul.bf16.gmra.mxu0 %v36
    %v47 = vpop.f32.mrf.mxu0
    %v48 = vadd.f32 %v32, %v47
    %v49 = vpop.f32.mrf.mxu0
    %v50 = vadd.f32 %v32, %v49
    %51 = vdwg.mxu0
    %52 = vst [vmem:[#allocation2] sm:$0xff] %v48
    %53 = vst [vmem:[#allocation2 + $0x8] sm:$0xff] %v50
    %v54 = vpack.c.bf16 %v50, %v48
    %v55 = vld [vmem:[%s3] sm:$0xff]
    %v56 = vld [vmem:[%s3 + $0x8] sm:$0xff]
    %v57 = vld [vmem:[%s3 + $0x10] sm:$0xff]
    %v58 = vld [vmem:[%s3 + $0x18] sm:$0xff]
    %v59 = vld [vmem:[%s3 + $0x20] sm:$0xff]
    %v60 = vld [vmem:[%s3 + $0x28] sm:$0xff]
    %v61 = vld [vmem:[%s3 + $0x30] sm:$0xff]
    %v62 = vld [vmem:[%s3 + $0x38] sm:$0xff]
    %v63 = vld [vmem:[%s3 + $0x40] sm:$0xff]
    %v64 = vld [vmem:[%s3 + $0x48] sm:$0xff]
    %v65 = vld [vmem:[%s3 + $0x50] sm:$0xff]
    %v66 = vld [vmem:[%s3 + $0x58] sm:$0xff]
    %v67 = vld [vmem:[%s3 + $0x60] sm:$0xff]
    %v68 = vld [vmem:[%s3 + $0x68] sm:$0xff]
    %v69 = vld [vmem:[%s3 + $0x70] sm:$0xff]
    %v70 = vld [vmem:[%s3 + $0x78] sm:$0xff]
    %v71 = vpack.c.bf16 %v56, %v55
    %v72 = vpack.c.bf16 %v58, %v57
    %v73 = vpack.c.bf16 %v60, %v59
    %v74 = vpack.c.bf16 %v62, %v61
    %v75 = vpack.c.bf16 %v64, %v63
    %v76 = vpack.c.bf16 %v66, %v65
    %v77 = vpack.c.bf16 %v68, %v67
    %v78 = vpack.c.bf16 %v70, %v69
    %79 = vmatpush.bf16.msra.mxu0 %v78
    %80 = vmatpush.bf16.msra.mxu0 %v77
    %81 = vmatpush.bf16.msra.mxu0 %v76
    %82 = vmatpush.bf16.msra.mxu0 %v75
    %83 = vmatpush.bf16.msra.mxu0 %v74
    %84 = vmatpush.bf16.msra.mxu0 %v73
    %85 = vmatpush.bf16.msra.mxu0 %v72
    %86 = vmatpush.bf16.msra.mxu0 %v71
    %87 = vmatmul.bf16.gmra.mxu0 %v54
    %v88 = vpop.f32.mrf.mxu0
    %v89 = vadd.f32 0.0, %v88
    %v90 = vpop.f32.mrf.mxu0
    %v91 = vadd.f32 0.0, %v90
    %92 = vdwg.mxu0
    %vm93 = vcmask 15360
    %94 = vst.msk [vmem:[%s5] sm:$0xff] %vm93, %v89
    %95 = vst.msk [vmem:[%s5 + $0x8] sm:$0xff] %vm93, %v91
    // Predicated region
    $region18: #{tpu_custom_call.1} parent=1 // pred_check
      _
    $region19: #{tpu_custom_call.1} parent=1 // pred_check_branch
      %97 = sbr.rel (0) target = $region21
    $region20: #{tpu_custom_call.1} parent=1 // pred_region
      %99 = vsyncadd [#allocation3], 0
      %s100 = sshll.u32 [#allocation2], 4
      %s101 = int_to_ptr.vmem [resolvable:$true] %s100
      %s102 = sshll.u32 %s4, 4
      %s103 = int_to_ptr.hbm [resolvable:$true] %s102
      %108 = dma.vmem_to_hbm [thread:$0]  %s101, 256, %s103, [#allocation3], 128, 128, 8
    $region21: #{tpu_custom_call.1} parent=1 // pred_fallthru
      _
    // Predicated region
    $region22: #{tpu_custom_call.1} parent=1 // pred_check
      _
    $region23: #{tpu_custom_call.1} parent=1 // pred_check_branch
      %110 = sbr.rel (0) target = $region25
    $region24: #{tpu_custom_call.1} parent=1 // pred_region
      _
    $region25: #{tpu_custom_call.1} parent=1 // pred_fallthru
      _
    // Predicated region
    $region26: #{tpu_custom_call.1} parent=1 // pred_check
      _
    $region27: #{tpu_custom_call.1} parent=1 // pred_check_branch
      %112 = sbr.rel (0) target = $region29
    $region28: #{tpu_custom_call.1} parent=1 // pred_region
      %114 = dma.done [#allocation3], 256
    $region29: #{tpu_custom_call.1} parent=1 // pred_fallthru
      _
    // Predicated region
    $region30: #{tpu_custom_call.1} parent=1 // pred_check
      _
    $region31: #{tpu_custom_call.1} parent=1 // pred_check_branch
      %116 = sbr.rel (0) target = $region33
    $region32: #{tpu_custom_call.1} parent=1 // pred_region
      _
    $region33: #{tpu_custom_call.1} parent=1 // pred_fallthru
      _
    %117 = vsyncpa [#allocation3], 1

</llo_original>
